<compile_context>
chip_gen: v5e
topology: v5e:2x2
jax: 0.10.0
libtpu: 0.0.40
codegen_flags: <defaults>
</compile_context>

<pallas_src>
import functools

import jax
import jax.numpy as jnp
from jax.experimental import pallas as pl
from jax.experimental.pallas import tpu as pltpu


def _attention_kernel(x_ref, wqkv_ref, bqkv_ref, wfc_ref, bfc_ref,
                      o_ref, qkv_ref, *, n_head, head_dim, q_tile,
                      approx_reciprocal):
    """One (batch, query-tile) grid step.

    x_ref    : (T, D)   compute dtype -- full sequence for this batch element
    wqkv_ref : (D, 3D)  fused QKV weights (Q columns pre-scaled by 1/sqrt(Dh))
    bqkv_ref : (1, 3D)  fused QKV bias, f32 (Q part pre-scaled)
    wfc_ref  : (D, D)   output projection weights
    bfc_ref  : (1, D)   output projection bias, f32
    o_ref    : (Tq, D)  output tile
    qkv_ref  : (T, 3D)  VMEM scratch: fused QKV projection of the current
                        batch element, computed once at qi == 0
    """
    D = n_head * head_dim
    cd = qkv_ref.dtype
    seq = qkv_ref.shape[0]

    # ---- fused QKV projection: ONE wide (T, D) @ (D, 3D) matmul per batch ----
    @pl.when(pl.program_id(1) == 0)
    def _():
        qkv = jnp.dot(x_ref[...], wqkv_ref[...],
                      preferred_element_type=jnp.float32) + bqkv_ref[...]
        qkv_ref[...] = qkv.astype(cd)

    if q_tile == seq:                       # static decision: no row slicing
        q_rows = slice(None)
    else:
        row0 = pl.multiple_of(pl.program_id(1) * q_tile, q_tile)
        q_rows = pl.ds(row0, q_tile)

    # ---- per-head attention (static unrolled loop; H is small for ViT) ----
    ctx_parts = []
    for h in range(n_head):
        c0 = h * head_dim
        q_h = qkv_ref[q_rows, c0:c0 + head_dim]               # (Tq, Dh), pre-scaled
        k_h = qkv_ref[:, D + c0:D + c0 + head_dim]            # (T,  Dh)
        v_h = qkv_ref[:, 2 * D + c0:2 * D + c0 + head_dim]    # (T,  Dh)

        # scores = q_h @ k_h^T   (1/sqrt(Dh) already folded into W_q / b_q).
        s = jax.lax.dot_general(q_h, k_h, (((1,), (1,)), ((), ())),
                                preferred_element_type=jnp.float32)   # (Tq, T)

        # Numerically stable softmax in f32; reciprocal on the EUP slot.
        m = jnp.max(s, axis=-1, keepdims=True)
        e = jnp.exp(s - m)
        denom = jnp.sum(e, axis=-1, keepdims=True)
        if approx_reciprocal:
            p = e * pl.reciprocal(denom, approx=True)
        else:
            p = e / denom

        ctx_parts.append(
            jnp.dot(p.astype(cd), v_h,
                    preferred_element_type=jnp.float32).astype(cd))   # (Tq, Dh)

    ctx = ctx_parts[0] if n_head == 1 else jnp.concatenate(ctx_parts, axis=-1)

    # Output projection: one full-width matmul, lane-dense (Tq, D) store.
    out = jnp.dot(ctx, wfc_ref[...],
                  preferred_element_type=jnp.float32) + bfc_ref[...]
    o_ref[...] = out.astype(o_ref.dtype)


def attention_pallas(x, wqkv, bqkv, wfc, bfc, *, n_head, q_tile=None,
                     compute_dtype=jnp.bfloat16, approx_reciprocal=True):
    """Multi-head self-attention matching the PyTorch `Attention.forward`.

    x    : (B, T, D)
    wqkv : (D, 3D)   (pre-transposed nn.Linear weight; y = x @ W + b)
    bqkv : (3D,)
    wfc  : (D, D)
    bfc  : (D,)
    """
    B, T, D = x.shape
    H = n_head
    assert D % H == 0, "hidden size must be divisible by n_head"
    Dh = D // H
    inv_discount = 1.0 / (float(Dh) ** 0.5)
    out_dtype = x.dtype

    # ---- host-side parameter prep (plain XLA ops, effectively free) ----
    # Fold 1/sqrt(Dh) into the Q columns of the fused QKV projection.
    col_scale = jnp.concatenate([
        jnp.full((D,), inv_discount, dtype=jnp.float32),
        jnp.ones((2 * D,), dtype=jnp.float32)])
    wqkv_c = (wqkv.astype(jnp.float32) * col_scale[None, :]).astype(compute_dtype)  # (D, 3D)
    bqkv_c = (bqkv.astype(jnp.float32) * col_scale).reshape(1, 3 * D)               # (1, 3D) f32
    wfc_c = wfc.astype(compute_dtype)                                               # (D, D)
    bfc_c = bfc.astype(jnp.float32).reshape(1, D)                                   # (1, D) f32
    xc = x.astype(compute_dtype)

    # Query tiling: a single tile for short sequences; 256-row tiles for long
    # ones (matches the 256-wide MXU on v6e/v7x and halves per-step overhead).
    if q_tile is None:
        if T % 256 == 0 and T >= 512:
            q_tile = 256
        elif T % 128 == 0 and T >= 256:
            q_tile = 128
        else:
            q_tile = T
    assert T % q_tile == 0, "q_tile must divide the sequence length"
    nq = T // q_tile

    kernel = functools.partial(
        _attention_kernel, n_head=H, head_dim=Dh, q_tile=q_tile,
        approx_reciprocal=approx_reciprocal)

    grid_spec = pltpu.PrefetchScalarGridSpec(
        num_scalar_prefetch=0,
        grid=(B, nq),
        in_specs=[
            # x: full sequence for this batch element.  Block index changes
            # only with b, so the pipeline fetches it once per batch element.
            pl.BlockSpec((None, T, D), lambda b, qi: (b, 0, 0)),
            # Weights / biases: constant block index -> DMA'd once at startup
            # and VMEM-resident for the whole grid.
            pl.BlockSpec((D, 3 * D), lambda b, qi: (0, 0)),   # W_qkv (fused)
            pl.BlockSpec((1, 3 * D), lambda b, qi: (0, 0)),   # b_qkv (fused)
            pl.BlockSpec((D, D), lambda b, qi: (0, 0)),       # W_fc
            pl.BlockSpec((1, D), lambda b, qi: (0, 0)),       # b_fc
        ],
        out_specs=pl.BlockSpec((None, q_tile, D), lambda b, qi: (b, qi, 0)),
        # Fused QKV projection for the current batch element (bf16).
        scratch_shapes=[pltpu.VMEM((T, 3 * D), compute_dtype)],
    )

    return pl.pallas_call(
        kernel,
        out_shape=jax.ShapeDtypeStruct((B, T, D), out_dtype),
        grid_spec=grid_spec,
        compiler_params=pltpu.CompilerParams(
            # Batch axis parallel (shardable); query-tile axis arbitrary so the
            # once-per-batch QKV-scratch pattern is preserved.
            dimension_semantics=("parallel", "arbitrary"),
            vmem_limit_bytes=48 * 1024 * 1024),
    )(xc, wqkv_c, bqkv_c, wfc_c, bfc_c)


def attention_reference(x, wqkv, bqkv, wfc, bfc, *, n_head):
    """Pure-JAX f32 reference mirroring the PyTorch forward exactly."""
    B, T, D = x.shape
    head_dim = D // n_head
    discount = float(head_dim) ** 0.5
    qkv = x @ wqkv + bqkv                                   # (B, T, 3D)
    qkv = qkv.reshape(B, T, 3, n_head, head_dim)
    qkv = jnp.transpose(qkv, (2, 0, 3, 1, 4))               # (3, B, H, T, Dh)
    q, k, v = qkv[0], qkv[1], qkv[2]
    scores = jnp.einsum('bhqd,bhkd->bhqk', q, k) / discount
    attn = jax.nn.softmax(scores, axis=-1)
    ctx = jnp.einsum('bhqk,bhkd->bhqd', attn, v)            # (B, H, T, Dh)
    ctx = jnp.transpose(ctx, (0, 2, 1, 3)).reshape(B, T, D)
    return ctx @ wfc + bfc


if __name__ == "__main__":
    # Small shapes consistent with the module: batch=2, seq=8, hidden=32, heads=4.
    B, T, D, H = 2, 8, 32, 4

    key = jax.random.PRNGKey(0)
    kx, kw1, kb1, kw2, kb2 = jax.random.split(key, 5)

    x = jax.random.normal(kx, (B, T, D), dtype=jnp.float32)
    # Deterministic parameter init (synthetic; (in, out) layout so y = x @ W + b).
    wqkv = jax.random.normal(kw1, (D, 3 * D), dtype=jnp.float32) * 0.05
    bqkv = jax.random.normal(kb1, (3 * D,), dtype=jnp.float32) * 0.05
    wfc = jax.random.normal(kw2, (D, D), dtype=jnp.float32) * 0.05
    bfc = jax.random.normal(kb2, (D,), dtype=jnp.float32) * 0.05

    out = attention_pallas(x, wqkv, bqkv, wfc, bfc, n_head=H)
    out = jax.block_until_ready(out)

    ref = attention_reference(x, wqkv, bqkv, wfc, bfc, n_head=H)
    assert out.shape == (B, T, D)
    # bf16 MXU operands with f32 accumulation -> compare at bf16-appropriate tolerance.
    assert jnp.allclose(out, ref, atol=2e-2, rtol=2e-2), "mismatch vs JAX reference"

    print("KERNEL_OK")
</pallas_src>

<mosaic_0001>
module attributes {stable_mosaic.version = 11 : i64} {
  func.func @_attention_kernel(%arg0: i32, %arg1: i32, %arg2: memref<1x8x32xbf16, #tpu.memory_space<vmem>>, %arg3: memref<32x96xbf16, #tpu.memory_space<vmem>>, %arg4: memref<1x96xf32, #tpu.memory_space<vmem>>, %arg5: memref<32x32xbf16, #tpu.memory_space<vmem>>, %arg6: memref<1x32xf32, #tpu.memory_space<vmem>>, %arg7: memref<1x8x32xf32, #tpu.memory_space<vmem>>, %arg8: memref<8x96xbf16, #tpu.memory_space<vmem>>) attributes {dimension_semantics = [#tpu.dimension_semantics<parallel>, #tpu.dimension_semantics<arbitrary>], iteration_bounds = array<i64: 2, 1>, scalar_prefetch = 0 : i64, scratch_operands = 1 : i64, tpu.core_type = #tpu.core_type<tc>, window_params = [{transform_indices = @transform_0, window_bounds = array<i64: 1, 8, 32>}, {pipeline_mode = #tpu.pipeline_mode<synchronous>, transform_indices = @transform_1, window_bounds = array<i64: 32, 96>}, {pipeline_mode = #tpu.pipeline_mode<synchronous>, transform_indices = @transform_2, window_bounds = array<i64: 1, 96>}, {pipeline_mode = #tpu.pipeline_mode<synchronous>, transform_indices = @transform_3, window_bounds = array<i64: 32, 32>}, {pipeline_mode = #tpu.pipeline_mode<synchronous>, transform_indices = @transform_4, window_bounds = array<i64: 1, 32>}, {transform_indices = @transform_5, window_bounds = array<i64: 1, 8, 32>}]} {
    %c0_i32 = arith.constant 0 : i32
    %0 = arith.cmpi eq, %arg1, %c0_i32 : i32
    %1 = arith.extui %0 : i1 to i32
    %c0_i32_0 = arith.constant 0 : i32
    %2 = arith.cmpi ne, %1, %c0_i32_0 : i32
    scf.if %2 {
      %c0_36 = arith.constant 0 : index
      %c0_37 = arith.constant 0 : index
      %c0_38 = arith.constant 0 : index
      %80 = vector.load %arg2[%c0_36, %c0_37, %c0_38] : memref<1x8x32xbf16, #tpu.memory_space<vmem>>, vector<1x8x32xbf16>
      %81 = vector.shape_cast %80 : vector<1x8x32xbf16> to vector<8x32xbf16>
      %c0_39 = arith.constant 0 : index
      %c0_40 = arith.constant 0 : index
      %82 = vector.load %arg3[%c0_39, %c0_40] : memref<32x96xbf16, #tpu.memory_space<vmem>>, vector<32x96xbf16>
      %cst_41 = arith.constant dense<0.000000e+00> : vector<8x96xf32>
      %83 = tpu.matmul %81, %82, %cst_41 {dimension_numbers = #tpu.dot_dimension_numbers<[1], [0], [0], [1], [0, 0, 1, 1], [], []>} : vector<8x32xbf16>, vector<32x96xbf16>, vector<8x96xf32> -> vector<8x96xf32>
      %c0_42 = arith.constant 0 : index
      %c0_43 = arith.constant 0 : index
      %84 = vector.load %arg4[%c0_42, %c0_43] : memref<1x96xf32, #tpu.memory_space<vmem>>, vector<1x96xf32>
      %85 = vector.broadcast %84 : vector<1x96xf32> to vector<8x96xf32>
      %86 = arith.addf %83, %85 : vector<8x96xf32>
      %87 = arith.truncf %86 : vector<8x96xf32> to vector<8x96xbf16>
      %c0_44 = arith.constant 0 : index
      %c0_45 = arith.constant 0 : index
      %88 = vector.load %arg8[%c0_44, %c0_45] : memref<8x96xbf16, #tpu.memory_space<vmem>>, vector<8x96xbf16>
      tpu.vector_store %arg8[%c0_44, %c0_45], %87 {strides = array<i32>} : memref<8x96xbf16, #tpu.memory_space<vmem>>, vector<8x96xbf16>,
    } else {
    }
    %c0 = arith.constant 0 : index
    %c0_1 = arith.constant 0 : index
    %3 = vector.load %arg8[%c0, %c0_1] : memref<8x96xbf16, #tpu.memory_space<vmem>>, vector<8x8xbf16>
    %c0_2 = arith.constant 0 : index
    %c32 = arith.constant 32 : index
    %4 = vector.load %arg8[%c0_2, %c32] : memref<8x96xbf16, #tpu.memory_space<vmem>>, vector<8x8xbf16>
    %c0_3 = arith.constant 0 : index
    %c64 = arith.constant 64 : index
    %5 = vector.load %arg8[%c0_3, %c64] : memref<8x96xbf16, #tpu.memory_space<vmem>>, vector<8x8xbf16>
    %cst = arith.constant dense<0.000000e+00> : vector<8x8xf32>
    %6 = tpu.matmul %3, %4, %cst {dimension_numbers = #tpu.dot_dimension_numbers<[1], [1], [0], [0], [0, 0, 1, 0], [], []>} : vector<8x8xbf16>, vector<8x8xbf16>, vector<8x8xf32> -> vector<8x8xf32>
    %cst_4 = arith.constant dense<0xFF800000> : vector<8xf32>
    %7 = vector.multi_reduction <maximumf>, %6, %cst_4 [1] : vector<8x8xf32> to vector<8xf32>
    %8 = vector.shape_cast %7 : vector<8xf32> to vector<8x1xf32>
    %9 = vector.broadcast %8 : vector<8x1xf32> to vector<8x8xf32>
    %10 = arith.subf %6, %9 : vector<8x8xf32>
    %11 = math.exp %10 : vector<8x8xf32>
    %cst_5 = arith.constant dense<0.000000e+00> : vector<8xf32>
    %12 = vector.multi_reduction <add>, %11, %cst_5 [1] : vector<8x8xf32> to vector<8xf32>
    %13 = vector.shape_cast %12 : vector<8xf32> to vector<8x1xf32>
    %14 = tpu.reciprocal %13 {approx = true} : vector<8x1xf32> -> vector<8x1xf32>
    %15 = vector.broadcast %14 : vector<8x1xf32> to vector<8x8xf32>
    %16 = arith.mulf %11, %15 : vector<8x8xf32>
    %17 = arith.truncf %16 : vector<8x8xf32> to vector<8x8xbf16>
    %cst_6 = arith.constant dense<0.000000e+00> : vector<8x8xf32>
    %18 = tpu.matmul %17, %5, %cst_6 {dimension_numbers = #tpu.dot_dimension_numbers<[1], [0], [0], [1], [0, 0, 1, 1], [], []>} : vector<8x8xbf16>, vector<8x8xbf16>, vector<8x8xf32> -> vector<8x8xf32>
    %19 = arith.truncf %18 : vector<8x8xf32> to vector<8x8xbf16>
    %c0_7 = arith.constant 0 : index
    %c8 = arith.constant 8 : index
    %20 = vector.load %arg8[%c0_7, %c8] : memref<8x96xbf16, #tpu.memory_space<vmem>>, vector<8x8xbf16>
    %c0_8 = arith.constant 0 : index
    %c40 = arith.constant 40 : index
    %21 = vector.load %arg8[%c0_8, %c40] : memref<8x96xbf16, #tpu.memory_space<vmem>>, vector<8x8xbf16>
    %c0_9 = arith.constant 0 : index
    %c72 = arith.constant 72 : index
    %22 = vector.load %arg8[%c0_9, %c72] : memref<8x96xbf16, #tpu.memory_space<vmem>>, vector<8x8xbf16>
    %cst_10 = arith.constant dense<0.000000e+00> : vector<8x8xf32>
    %23 = tpu.matmul %20, %21, %cst_10 {dimension_numbers = #tpu.dot_dimension_numbers<[1], [1], [0], [0], [0, 0, 1, 0], [], []>} : vector<8x8xbf16>, vector<8x8xbf16>, vector<8x8xf32> -> vector<8x8xf32>
    %cst_11 = arith.constant dense<0xFF800000> : vector<8xf32>
    %24 = vector.multi_reduction <maximumf>, %23, %cst_11 [1] : vector<8x8xf32> to vector<8xf32>
    %25 = vector.shape_cast %24 : vector<8xf32> to vector<8x1xf32>
    %26 = vector.broadcast %25 : vector<8x1xf32> to vector<8x8xf32>
    %27 = arith.subf %23, %26 : vector<8x8xf32>
    %28 = math.exp %27 : vector<8x8xf32>
    %cst_12 = arith.constant dense<0.000000e+00> : vector<8xf32>
    %29 = vector.multi_reduction <add>, %28, %cst_12 [1] : vector<8x8xf32> to vector<8xf32>
    %30 = vector.shape_cast %29 : vector<8xf32> to vector<8x1xf32>
    %31 = tpu.reciprocal %30 {approx = true} : vector<8x1xf32> -> vector<8x1xf32>
    %32 = vector.broadcast %31 : vector<8x1xf32> to vector<8x8xf32>
    %33 = arith.mulf %28, %32 : vector<8x8xf32>
    %34 = arith.truncf %33 : vector<8x8xf32> to vector<8x8xbf16>
    %cst_13 = arith.constant dense<0.000000e+00> : vector<8x8xf32>
    %35 = tpu.matmul %34, %22, %cst_13 {dimension_numbers = #tpu.dot_dimension_numbers<[1], [0], [0], [1], [0, 0, 1, 1], [], []>} : vector<8x8xbf16>, vector<8x8xbf16>, vector<8x8xf32> -> vector<8x8xf32>
    %36 = arith.truncf %35 : vector<8x8xf32> to vector<8x8xbf16>
    %c0_14 = arith.constant 0 : index
    %c16 = arith.constant 16 : index
    %37 = vector.load %arg8[%c0_14, %c16] : memref<8x96xbf16, #tpu.memory_space<vmem>>, vector<8x8xbf16>
    %c0_15 = arith.constant 0 : index
    %c48 = arith.constant 48 : index
    %38 = vector.load %arg8[%c0_15, %c48] : memref<8x96xbf16, #tpu.memory_space<vmem>>, vector<8x8xbf16>
    %c0_16 = arith.constant 0 : index
    %c80 = arith.constant 80 : index
    %39 = vector.load %arg8[%c0_16, %c80] : memref<8x96xbf16, #tpu.memory_space<vmem>>, vector<8x8xbf16>
    %cst_17 = arith.constant dense<0.000000e+00> : vector<8x8xf32>
    %40 = tpu.matmul %37, %38, %cst_17 {dimension_numbers = #tpu.dot_dimension_numbers<[1], [1], [0], [0], [0, 0, 1, 0], [], []>} : vector<8x8xbf16>, vector<8x8xbf16>, vector<8x8xf32> -> vector<8x8xf32>
    %cst_18 = arith.constant dense<0xFF800000> : vector<8xf32>
    %41 = vector.multi_reduction <maximumf>, %40, %cst_18 [1] : vector<8x8xf32> to vector<8xf32>
    %42 = vector.shape_cast %41 : vector<8xf32> to vector<8x1xf32>
    %43 = vector.broadcast %42 : vector<8x1xf32> to vector<8x8xf32>
    %44 = arith.subf %40, %43 : vector<8x8xf32>
    %45 = math.exp %44 : vector<8x8xf32>
    %cst_19 = arith.constant dense<0.000000e+00> : vector<8xf32>
    %46 = vector.multi_reduction <add>, %45, %cst_19 [1] : vector<8x8xf32> to vector<8xf32>
    %47 = vector.shape_cast %46 : vector<8xf32> to vector<8x1xf32>
    %48 = tpu.reciprocal %47 {approx = true} : vector<8x1xf32> -> vector<8x1xf32>
    %49 = vector.broadcast %48 : vector<8x1xf32> to vector<8x8xf32>
    %50 = arith.mulf %45, %49 : vector<8x8xf32>
    %51 = arith.truncf %50 : vector<8x8xf32> to vector<8x8xbf16>
    %cst_20 = arith.constant dense<0.000000e+00> : vector<8x8xf32>
    %52 = tpu.matmul %51, %39, %cst_20 {dimension_numbers = #tpu.dot_dimension_numbers<[1], [0], [0], [1], [0, 0, 1, 1], [], []>} : vector<8x8xbf16>, vector<8x8xbf16>, vector<8x8xf32> -> vector<8x8xf32>
    %53 = arith.truncf %52 : vector<8x8xf32> to vector<8x8xbf16>
    %c0_21 = arith.constant 0 : index
    %c24 = arith.constant 24 : index
    %54 = vector.load %arg8[%c0_21, %c24] : memref<8x96xbf16, #tpu.memory_space<vmem>>, vector<8x8xbf16>
    %c0_22 = arith.constant 0 : index
    %c56 = arith.constant 56 : index
    %55 = vector.load %arg8[%c0_22, %c56] : memref<8x96xbf16, #tpu.memory_space<vmem>>, vector<8x8xbf16>
    %c0_23 = arith.constant 0 : index
    %c88 = arith.constant 88 : index
    %56 = vector.load %arg8[%c0_23, %c88] : memref<8x96xbf16, #tpu.memory_space<vmem>>, vector<8x8xbf16>
    %cst_24 = arith.constant dense<0.000000e+00> : vector<8x8xf32>
    %57 = tpu.matmul %54, %55, %cst_24 {dimension_numbers = #tpu.dot_dimension_numbers<[1], [1], [0], [0], [0, 0, 1, 0], [], []>} : vector<8x8xbf16>, vector<8x8xbf16>, vector<8x8xf32> -> vector<8x8xf32>
    %cst_25 = arith.constant dense<0xFF800000> : vector<8xf32>
    %58 = vector.multi_reduction <maximumf>, %57, %cst_25 [1] : vector<8x8xf32> to vector<8xf32>
    %59 = vector.shape_cast %58 : vector<8xf32> to vector<8x1xf32>
    %60 = vector.broadcast %59 : vector<8x1xf32> to vector<8x8xf32>
    %61 = arith.subf %57, %60 : vector<8x8xf32>
    %62 = math.exp %61 : vector<8x8xf32>
    %cst_26 = arith.constant dense<0.000000e+00> : vector<8xf32>
    %63 = vector.multi_reduction <add>, %62, %cst_26 [1] : vector<8x8xf32> to vector<8xf32>
    %64 = vector.shape_cast %63 : vector<8xf32> to vector<8x1xf32>
    %65 = tpu.reciprocal %64 {approx = true} : vector<8x1xf32> -> vector<8x1xf32>
    %66 = vector.broadcast %65 : vector<8x1xf32> to vector<8x8xf32>
    %67 = arith.mulf %62, %66 : vector<8x8xf32>
    %68 = arith.truncf %67 : vector<8x8xf32> to vector<8x8xbf16>
    %cst_27 = arith.constant dense<0.000000e+00> : vector<8x8xf32>
    %69 = tpu.matmul %68, %56, %cst_27 {dimension_numbers = #tpu.dot_dimension_numbers<[1], [0], [0], [1], [0, 0, 1, 1], [], []>} : vector<8x8xbf16>, vector<8x8xbf16>, vector<8x8xf32> -> vector<8x8xf32>
    %70 = arith.truncf %69 : vector<8x8xf32> to vector<8x8xbf16>
    %71 = tpu.concatenate %19, %36, %53, %70 in 1 : vector<8x8xbf16>, vector<8x8xbf16>, vector<8x8xbf16>, vector<8x8xbf16> -> vector<8x32xbf16>
    %c0_28 = arith.constant 0 : index
    %c0_29 = arith.constant 0 : index
    %72 = vector.load %arg5[%c0_28, %c0_29] : memref<32x32xbf16, #tpu.memory_space<vmem>>, vector<32x32xbf16>
    %cst_30 = arith.constant dense<0.000000e+00> : vector<8x32xf32>
    %73 = tpu.matmul %71, %72, %cst_30 {dimension_numbers = #tpu.dot_dimension_numbers<[1], [0], [0], [1], [0, 0, 1, 1], [], []>} : vector<8x32xbf16>, vector<32x32xbf16>, vector<8x32xf32> -> vector<8x32xf32>
    %c0_31 = arith.constant 0 : index
    %c0_32 = arith.constant 0 : index
    %74 = vector.load %arg6[%c0_31, %c0_32] : memref<1x32xf32, #tpu.memory_space<vmem>>, vector<1x32xf32>
    %75 = vector.broadcast %74 : vector<1x32xf32> to vector<8x32xf32>
    %76 = arith.addf %73, %75 : vector<8x32xf32>
    %c0_33 = arith.constant 0 : index
    %c0_34 = arith.constant 0 : index
    %c0_35 = arith.constant 0 : index
    %77 = vector.load %arg7[%c0_33, %c0_34, %c0_35] : memref<1x8x32xf32, #tpu.memory_space<vmem>>, vector<1x8x32xf32>
    %78 = vector.shape_cast %77 : vector<1x8x32xf32> to vector<8x32xf32>
    %79 = vector.shape_cast %76 : vector<8x32xf32> to vector<1x8x32xf32>
    tpu.vector_store %arg7[%c0_33, %c0_34, %c0_35], %79 {strides = array<i32>} : memref<1x8x32xf32, #tpu.memory_space<vmem>>, vector<1x8x32xf32>,
    return
  }
  func.func @transform_0(%arg0: i32, %arg1: i32) -> (i32, i32, i32) {
    %c0_i32 = arith.constant 0 : i32
    %c0_i32_0 = arith.constant 0 : i32
    %c0_i32_1 = arith.constant 0 : i32
    return %arg0, %c0_i32, %c0_i32_0 : i32, i32, i32
  }
  func.func @transform_1(%arg0: i32, %arg1: i32) -> (i32, i32) {
    %c0_i32 = arith.constant 0 : i32
    %c0_i32_0 = arith.constant 0 : i32
    %c0_i32_1 = arith.constant 0 : i32
    return %c0_i32, %c0_i32_0 : i32, i32
  }
  func.func @transform_2(%arg0: i32, %arg1: i32) -> (i32, i32) {
    %c0_i32 = arith.constant 0 : i32
    %c0_i32_0 = arith.constant 0 : i32
    %c0_i32_1 = arith.constant 0 : i32
    return %c0_i32, %c0_i32_0 : i32, i32
  }
  func.func @transform_3(%arg0: i32, %arg1: i32) -> (i32, i32) {
    %c0_i32 = arith.constant 0 : i32
    %c0_i32_0 = arith.constant 0 : i32
    %c0_i32_1 = arith.constant 0 : i32
    return %c0_i32, %c0_i32_0 : i32, i32
  }
  func.func @transform_4(%arg0: i32, %arg1: i32) -> (i32, i32) {
    %c0_i32 = arith.constant 0 : i32
    %c0_i32_0 = arith.constant 0 : i32
    %c0_i32_1 = arith.constant 0 : i32
    return %c0_i32, %c0_i32_0 : i32, i32
  }
  func.func @transform_5(%arg0: i32, %arg1: i32) -> (i32, i32, i32) {
    %c0_i32 = arith.constant 0 : i32
    %c0_i32_0 = arith.constant 0 : i32
    return %arg0, %arg1, %c0_i32 : i32, i32, i32
  }
}

</mosaic_0001>

<llo_original>
// kernel: tpu_custom_call.1
$region0: #{tpu_custom_call.1}
  #allocation0 [shape = 'u32[]', space=smem, size = 0x4, offset = 0x4, fixed_abs, tag = 'smem constant byte address 0x4 - core index']
  #allocation1 [shape = 'u32[72,128]{1,0:T(1,128)}', space=vmem, size = 0x9000, scoped, tag = 'internal scratch']
  #allocation2 [shape = 'bf16[8,96]{1,0:T(8,128)(2,1)}', space=vmem, size = 0x800, scoped, tag = 'scratch operand']
  %s0 = inlined_call_operand.hbm [shape: bf16[2,8,32], index: 0, kind: input, shape index: {}]
  %s1 = inlined_call_operand.hbm [shape: bf16[32,96], index: 1, kind: input, shape index: {}]
  %s2 = inlined_call_operand.vmem [shape: f32[1,96], index: 2, kind: input, shape index: {}]
  %s3 = inlined_call_operand.hbm [shape: bf16[32,32], index: 3, kind: input, shape index: {}]
  %s4 = inlined_call_operand.vmem [shape: f32[1,32], index: 4, kind: input, shape index: {}]
  %s5 = inlined_call_operand.hbm [shape: f32[2,8,32], index: 5, kind: output, shape index: {}]
  %s6 = sld [smem:[#allocation0]]
  $region69: #{tpu_custom_call.1} parent=0
    _
  %s8 = ssub.s32 1, %s6
  %s9 = scalar_select 0, %s8, %s6
  $region1: #{tpu_custom_call.1} parent=0
    #allocation3 [shape = 'u8[4096]{0}', space=vmem, size = 0x1000, scoped, tag = 'input window, operand 0']
    #allocation4 [shape = 's32[2]{0}', space=sflag, size = 0x8, scoped, tag = 'scoped memory for tpu_custom_call.1']
    #allocation5 [shape = 's32[2]{0}', space=sflag, size = 0x8, scoped, tag = 'scoped memory for tpu_custom_call.1']
    #allocation6 [shape = 'u8[8192]{0}', space=vmem, size = 0x2000, scoped, tag = 'input window, operand 1, single buffered']
    #allocation7 [shape = 's32[1]{0}', space=sflag, size = 0x4, scoped, tag = 'scoped memory for tpu_custom_call.1']
    #allocation8 [shape = 'u8[8192]{0}', space=vmem, size = 0x2000, scoped, tag = 'input window, operand 3, single buffered']
    #allocation9 [shape = 'u8[8192]{0}', space=vmem, size = 0x2000, scoped, tag = 'output window, operand 0']
    %10 = vsyncpa [#allocation4], 0
    %s11 = scalar_lea.sflag [#allocation4], 1
    %12 = vsyncpa %s11, 0
    %13 = vsyncpa [#allocation7], 0
    %14 = vsyncpa [#allocation5], 0
    %s15 = scalar_lea.sflag [#allocation5], 1
    %16 = vsyncpa %s15, 0
    loop: start=0, step=1, limit=4
    $region2: #{tpu_custom_call.1} parent=1 // loop_pre_header
      _
    $region3: #{tpu_custom_call.1} parent=1 // loop_header
      %s18 = sphi 0, %s22
      %p19 = scmp.ge.s32.totalorder %s18, 4
      %s25 = sphi 0, %s37
      %s26 = sphi 0, %s33
      %s27 = sphi 0, %s25
      %s28 = sphi 0, %s26
      %s29 = sphi 0, %s27
      %s30 = sphi 0, %s28
      %s40 = sphi 0, %s42
      %s43 = sphi 0, %s40
      %s44 = sphi 0, %s43
      %s60 = sphi 0, %s44
      %s64 = sphi 0, %s64
      %s66 = sphi 0, %s64
      %s67 = sphi 0, %s66
      %s81 = sphi 0, %s67
      %s85 = sphi 0, %s85
      %s87 = sphi 0, %s85
      %s88 = sphi 0, %s87
      %s102 = sphi 0, %s88
      %s106 = sphi 0, %s106
      %s108 = sphi 0, %s106
      %s109 = sphi 0, %s108
      %s123 = sphi 0, %s109
      %s127 = sphi 0, %s127
      %s129 = sphi 0, %s127
      %s130 = sphi 0, %s129
      %s144 = sphi 0, %s130
      %s152 = sphi 0, %s154
      %s155 = sphi 0, %s152
      %s156 = sphi 0, %s155
      %s172 = sphi 0, %s156
    $region4: #{tpu_custom_call.1} parent=1 // loop_header_branch
      %21 = sbr.rel (%p19) target = $region8
    $region5: #{tpu_custom_call.1} parent=1 // loop_body
      %s23 = ssub.s32 %s18, 1
      %s24 = ssub.s32 %s18, 2
      %s31 = sadd.s32 1, %s26
      %p32 = scmp.ge.s32.totalorder %s31, 1
      %s33 = scalar_select %p32, 0, %s31
      %s34 = sadd.s32 1, %s25
      %s35 = scalar_select %p32, %s34, %s25
      %p36 = scmp.ge.s32.totalorder %s35, 2
      %s37 = scalar_select %p36, 0, %s35
      %s38 = ssub.s32 %s25, %s37
      %p39 = scmp.eq.s32.totalorder %s38, 0
      %s41 = sadd.s32 %s40, 1
      %s42 = scalar_select %p39, %s40, %s41
      %p45 = pneg %p39
      %p46 = scmp.eq.s32.totalorder %s18, 1
      %p47 = por %p45, %p46
      %p48 = scmp.ne.s32.totalorder %s40, %s43
      %p49 = scmp.eq.s32.totalorder %s18, 0
      %p50 = por %p48, %p49
      %p51 = scmp.ne.s32.totalorder %s40, %s43
      %p52 = scmp.eq.s32.totalorder %s23, 1
      %p53 = por %p51, %p52
      %p54 = scmp.ne.s32.totalorder %s43, %s44
      %p55 = scmp.eq.s32.totalorder %s23, 0
      %p56 = por %p54, %p55
      %p57 = scmp.ne.s32.totalorder %s43, %s44
      %p58 = scmp.eq.s32.totalorder %s24, 1
      %p59 = por %p57, %p58
      %p61 = scmp.ne.s32.totalorder %s44, %s60
      %p62 = scmp.eq.s32.totalorder %s24, 0
      %p63 = por %p61, %p62
      %s65 = sadd.s32 %s64, 1
      %p68 = scmp.eq.s32.totalorder %s18, 1
      %p69 = scmp.ne.s32.totalorder %s64, %s66
      %p70 = scmp.eq.s32.totalorder %s18, 0
      %p71 = por %p69, %p70
      %p72 = scmp.ne.s32.totalorder %s64, %s66
      %p73 = scmp.eq.s32.totalorder %s23, 1
      %p74 = por %p72, %p73
      %p75 = scmp.ne.s32.totalorder %s66, %s67
      %p76 = scmp.eq.s32.totalorder %s23, 0
      %p77 = por %p75, %p76
      %p78 = scmp.ne.s32.totalorder %s66, %s67
      %p79 = scmp.eq.s32.totalorder %s24, 1
      %p80 = por %p78, %p79
      %p82 = scmp.ne.s32.totalorder %s67, %s81
      %p83 = scmp.eq.s32.totalorder %s24, 0
      %p84 = por %p82, %p83
      %s86 = sadd.s32 %s85, 1
      %p89 = scmp.eq.s32.totalorder %s18, 1
      %p90 = scmp.ne.s32.totalorder %s85, %s87
      %p91 = scmp.eq.s32.totalorder %s18, 0
      %p92 = por %p90, %p91
      %p93 = scmp.ne.s32.totalorder %s85, %s87
      %p94 = scmp.eq.s32.totalorder %s23, 1
      %p95 = por %p93, %p94
      %p96 = scmp.ne.s32.totalorder %s87, %s88
      %p97 = scmp.eq.s32.totalorder %s23, 0
      %p98 = por %p96, %p97
      %p99 = scmp.ne.s32.totalorder %s87, %s88
      %p100 = scmp.eq.s32.totalorder %s24, 1
      %p101 = por %p99, %p100
      %p103 = scmp.ne.s32.totalorder %s88, %s102
      %p104 = scmp.eq.s32.totalorder %s24, 0
      %p105 = por %p103, %p104
      %s107 = sadd.s32 %s106, 1
      %p110 = scmp.eq.s32.totalorder %s18, 1
      %p111 = scmp.ne.s32.totalorder %s106, %s108
      %p112 = scmp.eq.s32.totalorder %s18, 0
      %p113 = por %p111, %p112
      %p114 = scmp.ne.s32.totalorder %s106, %s108
      %p115 = scmp.eq.s32.totalorder %s23, 1
      %p116 = por %p114, %p115
      %p117 = scmp.ne.s32.totalorder %s108, %s109
      %p118 = scmp.eq.s32.totalorder %s23, 0
      %p119 = por %p117, %p118
      %p120 = scmp.ne.s32.totalorder %s108, %s109
      %p121 = scmp.eq.s32.totalorder %s24, 1
      %p122 = por %p120, %p121
      %p124 = scmp.ne.s32.totalorder %s109, %s123
      %p125 = scmp.eq.s32.totalorder %s24, 0
      %p126 = por %p124, %p125
      %s128 = sadd.s32 %s127, 1
      %p131 = scmp.eq.s32.totalorder %s18, 1
      %p132 = scmp.ne.s32.totalorder %s127, %s129
      %p133 = scmp.eq.s32.totalorder %s18, 0
      %p134 = por %p132, %p133
      %p135 = scmp.ne.s32.totalorder %s127, %s129
      %p136 = scmp.eq.s32.totalorder %s23, 1
      %p137 = por %p135, %p136
      %p138 = scmp.ne.s32.totalorder %s129, %s130
      %p139 = scmp.eq.s32.totalorder %s23, 0
      %p140 = por %p138, %p139
      %p141 = scmp.ne.s32.totalorder %s129, %s130
      %p142 = scmp.eq.s32.totalorder %s24, 1
      %p143 = por %p141, %p142
      %p145 = scmp.ne.s32.totalorder %s130, %s144
      %p146 = scmp.eq.s32.totalorder %s24, 0
      %p147 = por %p145, %p146
      %s148 = ssub.s32 %s25, %s37
      %s149 = ssub.s32 %s26, %s33
      %s150 = sor.u32 %s148, %s149
      %p151 = scmp.eq.s32.totalorder %s150, 0
      %s153 = sadd.s32 %s152, 1
      %s154 = scalar_select %p151, %s152, %s153
      %p157 = pneg %p151
      %p158 = scmp.eq.s32.totalorder %s18, 1
      %p159 = por %p157, %p158
      %p160 = scmp.ne.s32.totalorder %s152, %s155
      %p161 = scmp.eq.s32.totalorder %s18, 0
      %p162 = por %p160, %p161
      %p163 = scmp.ne.s32.totalorder %s152, %s155
      %p164 = scmp.eq.s32.totalorder %s23, 1
      %p165 = por %p163, %p164
      %p166 = scmp.ne.s32.totalorder %s155, %s156
      %p167 = scmp.eq.s32.totalorder %s23, 0
      %p168 = por %p166, %p167
      %p169 = scmp.ne.s32.totalorder %s155, %s156
      %p170 = scmp.eq.s32.totalorder %s24, 1
      %p171 = por %p169, %p170
      %p173 = scmp.ne.s32.totalorder %s156, %s172
      %p174 = scmp.eq.s32.totalorder %s24, 0
      %p175 = por %p173, %p174
      %p176 = scmp.le.s32.totalorder 1, %s18
      %p177 = scmp.lt.s32.totalorder %s18, 3
      %p178 = pnand %p176, %p177
      %p179 = pneg %p178
      // Predicated region
      $region9: #{tpu_custom_call.1} parent=5 // pred_check
        _
      $region10: #{tpu_custom_call.1} parent=5 // pred_check_branch
        %181 = sbr.rel (%p178) target = $region12
      $region11: #{tpu_custom_call.1} parent=5 // pred_region
        %s182 = ssub.s32 %s18, 1
        // Predicated region
        $region13: #{tpu_custom_call.1} parent=11 // pred_check
          %p183 = pneg %p77
        $region14: #{tpu_custom_call.1} parent=11 // pred_check_branch
          %185 = sbr.rel (%p183) target = $region16
        $region15: #{tpu_custom_call.1} parent=11 // pred_region
          %187 = vsyncadd [#allocation7], 0
          %s188 = sshll.u32 %s1, 4
          %s189 = int_to_ptr.hbm [resolvable:$true] %s188
          %s190 = sshll.u32 [#allocation6], 4
          %s191 = int_to_ptr.vmem [resolvable:$true] %s190
          %196 = dma.hbm_to_vmem [thread:$0]  %s189, 256, %s191, [#allocation7], 64, 64, 4
        $region16: #{tpu_custom_call.1} parent=11 // pred_fallthru
          _
        // Predicated region
        $region17: #{tpu_custom_call.1} parent=11 // pred_check
          %p197 = pneg %p98
        $region18: #{tpu_custom_call.1} parent=11 // pred_check_branch
          %199 = sbr.rel (%p197) target = $region20
        $region19: #{tpu_custom_call.1} parent=11 // pred_region
          _
        $region20: #{tpu_custom_call.1} parent=11 // pred_fallthru
          _
        // Predicated region
        $region21: #{tpu_custom_call.1} parent=11 // pred_check
          %p200 = pneg %p119
        $region22: #{tpu_custom_call.1} parent=11 // pred_check_branch
          %202 = sbr.rel (%p200) target = $region24
        $region23: #{tpu_custom_call.1} parent=11 // pred_region
          %204 = vsyncadd [#allocation7], 0
          %s205 = sshll.u32 %s3, 4
          %s206 = int_to_ptr.hbm [resolvable:$true] %s205
          %s207 = sshll.u32 [#allocation8], 4
          %s208 = int_to_ptr.vmem [resolvable:$true] %s207
          %213 = dma.hbm_to_vmem [thread:$0]  %s206, 256, %s208, [#allocation7], 64, 64, 4
        $region24: #{tpu_custom_call.1} parent=11 // pred_fallthru
          _
        // Predicated region
        $region25: #{tpu_custom_call.1} parent=11 // pred_check
          %p214 = pneg %p140
        $region26: #{tpu_custom_call.1} parent=11 // pred_check_branch
          %216 = sbr.rel (%p214) target = $region28
        $region27: #{tpu_custom_call.1} parent=11 // pred_region
          _
        $region28: #{tpu_custom_call.1} parent=11 // pred_fallthru
          _
      $region12: #{tpu_custom_call.1} parent=5 // pred_fallthru
        _
      %p217 = scmp.lt.s32.totalorder %s18, 2
      // Predicated region
      $region29: #{tpu_custom_call.1} parent=5 // pred_check
        %p218 = pneg %p217
      $region30: #{tpu_custom_call.1} parent=5 // pred_check_branch
        %220 = sbr.rel (%p218) target = $region32
      $region31: #{tpu_custom_call.1} parent=5 // pred_region
        // Predicated region
        $region33: #{tpu_custom_call.1} parent=31 // pred_check
          %p221 = pneg %p50
        $region34: #{tpu_custom_call.1} parent=31 // pred_check_branch
          %223 = sbr.rel (%p221) target = $region36
        $region35: #{tpu_custom_call.1} parent=31 // pred_region
          %s224 = sand.u32 %s40, 1
          %s225 = scalar_lea.sflag [#allocation4], %s224
          %s226 = sand.u32 %s40, 1
          %s227 = smul.addr %s226, 4
          %s228 = scalar_lea.vmem [#allocation3], %s227
          %230 = vsyncadd %s225, 0
          %s231 = smul.addr %s25, 4
          %s232 = scalar_lea.hbm %s0, %s231
          %s234 = sshll.u32 %s232, 4
          %s235 = int_to_ptr.hbm [resolvable:$true] %s234
          %s236 = sshll.u32 %s228, 4
          %s237 = int_to_ptr.vmem [resolvable:$true] %s236
          %239 = dma.hbm_to_vmem [thread:$0]  %s235, 64, %s237, %s225
        $region36: #{tpu_custom_call.1} parent=31 // pred_fallthru
          _
      $region32: #{tpu_custom_call.1} parent=5 // pred_fallthru
        _
      %p240 = scmp.le.s32.totalorder 1, %s18
      %p241 = scmp.lt.s32.totalorder %s18, 3
      %p242 = pnand %p240, %p241
      %p243 = pneg %p242
      // Predicated region
      $region37: #{tpu_custom_call.1} parent=5 // pred_check
        _
      $region38: #{tpu_custom_call.1} parent=5 // pred_check_branch
        %245 = sbr.rel (%p242) target = $region40
      $region39: #{tpu_custom_call.1} parent=5 // pred_region
        %s246 = ssub.s32 %s18, 1
        %s247 = sand.u32 %s43, 1
        %s248 = scalar_lea.sflag [#allocation4], %s247
        %s249 = sand.u32 %s43, 1
        %s250 = smul.addr %s249, 4
        %s251 = scalar_lea.vmem [#allocation3], %s250
        // Predicated region
        $region41: #{tpu_custom_call.1} parent=39 // pred_check
          %p252 = pneg %p56
        $region42: #{tpu_custom_call.1} parent=39 // pred_check_branch
          %254 = sbr.rel (%p252) target = $region44
        $region43: #{tpu_custom_call.1} parent=39 // pred_region
          %256 = dma.done %s248, 64
        $region44: #{tpu_custom_call.1} parent=39 // pred_fallthru
          _
        // Predicated region
        $region45: #{tpu_custom_call.1} parent=39 // pred_check
          %p257 = pneg %p77
        $region46: #{tpu_custom_call.1} parent=39 // pred_check_branch
          %259 = sbr.rel (%p257) target = $region48
        $region47: #{tpu_custom_call.1} parent=39 // pred_region
          %261 = dma.done [#allocation7], 256
        $region48: #{tpu_custom_call.1} parent=39 // pred_fallthru
          _
        // Predicated region
        $region49: #{tpu_custom_call.1} parent=39 // pred_check
          %p262 = pneg %p119
        $region50: #{tpu_custom_call.1} parent=39 // pred_check_branch
          %264 = sbr.rel (%p262) target = $region52
        $region51: #{tpu_custom_call.1} parent=39 // pred_region
          %266 = dma.done [#allocation7], 256
        $region52: #{tpu_custom_call.1} parent=39 // pred_fallthru
          _
        %s267 = sand.u32 %s43, 1
        %s268 = scalar_lea.sflag [#allocation4], %s267
        %s269 = sand.u32 %s43, 1
        %s270 = smul.addr %s269, 4
        %s271 = scalar_lea.vmem [#allocation3], %s270
        %p272 = pneg %p56
        %p273 = pneg %p53
        %p274 = pneg %p77
        %p275 = pneg %p74
        %p276 = pneg %p98
        %p277 = pneg %p95
        %p278 = pneg %p119
        %p279 = pneg %p116
        %p280 = pneg %p140
        %p281 = pneg %p137
        %p282 = pneg %p168
        %p283 = pneg %p165
        %s284 = sand.u32 %s155, 1
        %s285 = scalar_lea.sflag [#allocation5], %s284
        %s286 = sand.u32 %s155, 1
        %s287 = smul.addr %s286, 8
        %s288 = scalar_lea.vmem [#allocation9], %s287
        %p290 = scmp.eq.s32.totalorder %s28, 0
        // Predicated region
        $region53: #{tpu_custom_call.1} parent=39 // pred_check
          %p291 = pneg %p290
        $region54: #{tpu_custom_call.1} parent=39 // pred_check_branch
          %293 = sbr.rel (%p291) target = $region56
        $region55: #{tpu_custom_call.1} parent=39 // pred_region
          %v294 = vld [vmem:[%s251] sm:$0xf]
          %v295 = vld [vmem:[#allocation6] sm:$0xf]
          %v296 = vld [vmem:[#allocation6 + $0x4] sm:$0xf]
          %v297 = vld [vmem:[#allocation6 + $0x8] sm:$0xf]
          %v298 = vld [vmem:[#allocation6 + $0xc] sm:$0xf]
          %v299 = vld [vmem:[%s2] sm:$0x1]
          %v301 = vperm.slane %v299, 0
          %v307 = vunpack.c.l.b16 %v295
          %v308 = vunpack.c.l.b16 %v296
          %v309 = vunpack.c.l.b16 %v297
          %v310 = vunpack.c.l.b16 %v298
          %v311 = vpack.c.b16 %v308, %v307
          %v312 = vpack.c.b16 %v310, %v309
          %vm315 = vcmask 261120
          %v317 = vsel %vm315, %v294, 0
          %319 = vmatpush.bf16.msra.mxu0 0
          %320 = vmatpush.bf16.msra.mxu0 0
          %321 = vmatpush.bf16.msra.mxu0 0
          %322 = vmatpush.bf16.msra.mxu0 0
          %323 = vmatpush.bf16.msra.mxu0 0
          %324 = vmatpush.bf16.msra.mxu0 0
          %325 = vmatpush.bf16.msra.mxu0 %v312
          %326 = vmatpush.bf16.msra.mxu0 %v311
          %327 = vmatmul.bf16.gmra.mxu0 %v317
          %v328 = vpop.f32.mrf.mxu0
          %v329 = vadd.f32 %v301, %v328
          %v330 = vpop.f32.mrf.mxu0
          %331 = vdwg.mxu0
          %v332 = vpack.c.bf16 %v329, %v329
          %vm333 = vcmask 781312
          %334 = vst.msk [vmem:[#allocation2] sm:$0xf] %vm333, %v332
        $region56: #{tpu_custom_call.1} parent=39 // pred_fallthru
          _
        %v335 = vld [vmem:[#allocation2] sm:$0xf]
        %v337 = vunpack.c.l.b16 %v335
        %v338 = vpack.c.b16 %v337, %v337
        %339 = vrot.lane.b32.xlu0 %v338, 96
        %v340 = vpop.permute.xlu0 %339
        %vm341 = vcmask 64512
        %v343 = vsel %vm341, %v335, 0
        %v346 = vsel %vm341, %v340, 0
        %348 = vmatpush.bf16.xpose.msra.mxu0 0
        %349 = vmatpush.bf16.xpose.msra.mxu0 0
        %350 = vmatpush.bf16.xpose.msra.mxu0 0
        %351 = vmatpush.bf16.xpose.msra.mxu0 0
        %352 = vmatpush.bf16.xpose.msra.mxu0 0
        %353 = vmatpush.bf16.xpose.msra.mxu0 0
        %354 = vmatpush.bf16.xpose.msra.mxu0 0
        %355 = vmatpush.bf16.xpose.msra.mxu0 %v346
        %356 = vmatmul.bf16.gmra.mxu0 %v343
        %v357 = vpop.f32.mrf.mxu0
        %v358 = vadd.f32 0.0, %v357
        %v359 = vpop.f32.mrf.mxu0
        %360 = vdwg.mxu0
        %v361 = vsel %vm341, %v358, -inf
        %362 = vmax.xlane.f32.xlu0 %v361
        %v363 = vpop.xlane.xlu0 %362
        %v364 = vsub.f32 %v358, %v363
        %v365 = vmul.f32 %v364, 1.442695
        %v366 = vpow.pop %v365
        %v367 = vsel %vm341, %v366, 0.0
        %368 = vadd.xlane.f32.xlu0 %v367
        %v369 = vpop.xlane.xlu0 %368
        %v370 = vrcp.pop %v369
        %v371 = vmul.f32 %v366, %v370
        %v372 = vpack.c.bf16 %v371, %v371
        %373 = vrot.lane.b32.xlu0 %v338, 64
        %v374 = vpop.permute.xlu0 %373
        %v376 = vsel %vm341, %v372, 0
        %vm378 = vcmask 1043456
        %v380 = vsel %vm378, %v374, 0
        %382 = vmatpush.bf16.msra.mxu0 0
        %383 = vmatpush.bf16.msra.mxu0 0
        %384 = vmatpush.bf16.msra.mxu0 0
        %385 = vmatpush.bf16.msra.mxu0 0
        %386 = vmatpush.bf16.msra.mxu0 0
        %387 = vmatpush.bf16.msra.mxu0 0
        %388 = vmatpush.bf16.msra.mxu0 0
        %389 = vmatpush.bf16.msra.mxu0 %v380
        %390 = vmatmul.bf16.gmra.mxu0 %v376
        %v391 = vpop.f32.mrf.mxu0
        %v392 = vadd.f32 0.0, %v391
        %v393 = vpop.f32.mrf.mxu0
        %394 = vdwg.mxu0
        %v395 = vpack.c.bf16 %v392, %v392
        %396 = vrot.lane.b32.xlu0 %v338, 120
        %v397 = vpop.permute.xlu0 %396
        %398 = vrot.lane.b32.xlu0 %v338, 88
        %v399 = vpop.permute.xlu0 %398
        %v401 = vsel %vm341, %v397, 0
        %v404 = vsel %vm341, %v399, 0
        %406 = vmatpush.bf16.xpose.msra.mxu0 0
        %407 = vmatpush.bf16.xpose.msra.mxu0 0
        %408 = vmatpush.bf16.xpose.msra.mxu0 0
        %409 = vmatpush.bf16.xpose.msra.mxu0 0
        %410 = vmatpush.bf16.xpose.msra.mxu0 0
        %411 = vmatpush.bf16.xpose.msra.mxu0 0
        %412 = vmatpush.bf16.xpose.msra.mxu0 0
        %413 = vmatpush.bf16.xpose.msra.mxu0 %v404
        %414 = vmatmul.bf16.gmra.mxu0 %v401
        %v415 = vpop.f32.mrf.mxu0
        %v416 = vadd.f32 0.0, %v415
        %v417 = vpop.f32.mrf.mxu0
        %418 = vdwg.mxu0
        %v419 = vsel %vm341, %v416, -inf
        %420 = vmax.xlane.f32.xlu0 %v419
        %v421 = vpop.xlane.xlu0 %420
        %v422 = vsub.f32 %v416, %v421
        %v423 = vmul.f32 %v422, 1.442695
        %v424 = vpow.pop %v423
        %v425 = vsel %vm341, %v424, 0.0
        %426 = vadd.xlane.f32.xlu0 %v425
        %v427 = vpop.xlane.xlu0 %426
        %v428 = vrcp.pop %v427
        %v429 = vmul.f32 %v424, %v428
        %v430 = vpack.c.bf16 %v429, %v429
        %431 = vrot.lane.b32.xlu0 %v338, 56
        %v432 = vpop.permute.xlu0 %431
        %v434 = vsel %vm341, %v430, 0
        %v437 = vsel %vm378, %v432, 0
        %439 = vmatpush.bf16.msra.mxu0 0
        %440 = vmatpush.bf16.msra.mxu0 0
        %441 = vmatpush.bf16.msra.mxu0 0
        %442 = vmatpush.bf16.msra.mxu0 0
        %443 = vmatpush.bf16.msra.mxu0 0
        %444 = vmatpush.bf16.msra.mxu0 0
        %445 = vmatpush.bf16.msra.mxu0 0
        %446 = vmatpush.bf16.msra.mxu0 %v437
        %447 = vmatmul.bf16.gmra.mxu0 %v434
        %v448 = vpop.f32.mrf.mxu0
        %v449 = vadd.f32 0.0, %v448
        %v450 = vpop.f32.mrf.mxu0
        %451 = vdwg.mxu0
        %v452 = vpack.c.bf16 %v449, %v449
        %453 = vrot.lane.b32.xlu0 %v338, 112
        %v454 = vpop.permute.xlu0 %453
        %455 = vrot.lane.b32.xlu0 %v338, 80
        %v456 = vpop.permute.xlu0 %455
        %v458 = vsel %vm341, %v454, 0
        %v461 = vsel %vm341, %v456, 0
        %463 = vmatpush.bf16.xpose.msra.mxu0 0
        %464 = vmatpush.bf16.xpose.msra.mxu0 0
        %465 = vmatpush.bf16.xpose.msra.mxu0 0
        %466 = vmatpush.bf16.xpose.msra.mxu0 0
        %467 = vmatpush.bf16.xpose.msra.mxu0 0
        %468 = vmatpush.bf16.xpose.msra.mxu0 0
        %469 = vmatpush.bf16.xpose.msra.mxu0 0
        %470 = vmatpush.bf16.xpose.msra.mxu0 %v461
        %471 = vmatmul.bf16.gmra.mxu0 %v458
        %v472 = vpop.f32.mrf.mxu0
        %v473 = vadd.f32 0.0, %v472
        %v474 = vpop.f32.mrf.mxu0
        %475 = vdwg.mxu0
        %v476 = vsel %vm341, %v473, -inf
        %477 = vmax.xlane.f32.xlu0 %v476
        %v478 = vpop.xlane.xlu0 %477
        %v479 = vsub.f32 %v473, %v478
        %v480 = vmul.f32 %v479, 1.442695
        %v481 = vpow.pop %v480
        %v482 = vsel %vm341, %v481, 0.0
        %483 = vadd.xlane.f32.xlu0 %v482
        %v484 = vpop.xlane.xlu0 %483
        %v485 = vrcp.pop %v484
        %v486 = vmul.f32 %v481, %v485
        %v487 = vpack.c.bf16 %v486, %v486
        %488 = vrot.lane.b32.xlu0 %v338, 48
        %v489 = vpop.permute.xlu0 %488
        %v491 = vsel %vm341, %v487, 0
        %v494 = vsel %vm378, %v489, 0
        %496 = vmatpush.bf16.msra.mxu0 0
        %497 = vmatpush.bf16.msra.mxu0 0
        %498 = vmatpush.bf16.msra.mxu0 0
        %499 = vmatpush.bf16.msra.mxu0 0
        %500 = vmatpush.bf16.msra.mxu0 0
        %501 = vmatpush.bf16.msra.mxu0 0
        %502 = vmatpush.bf16.msra.mxu0 0
        %503 = vmatpush.bf16.msra.mxu0 %v494
        %504 = vmatmul.bf16.gmra.mxu0 %v491
        %v505 = vpop.f32.mrf.mxu0
        %v506 = vadd.f32 0.0, %v505
        %v507 = vpop.f32.mrf.mxu0
        %508 = vdwg.mxu0
        %v509 = vpack.c.bf16 %v506, %v506
        %510 = vrot.lane.b32.xlu0 %v338, 104
        %v511 = vpop.permute.xlu0 %510
        %512 = vrot.lane.b32.xlu0 %v338, 72
        %v513 = vpop.permute.xlu0 %512
        %v515 = vsel %vm341, %v511, 0
        %v518 = vsel %vm341, %v513, 0
        %520 = vmatpush.bf16.xpose.msra.mxu0 0
        %521 = vmatpush.bf16.xpose.msra.mxu0 0
        %522 = vmatpush.bf16.xpose.msra.mxu0 0
        %523 = vmatpush.bf16.xpose.msra.mxu0 0
        %524 = vmatpush.bf16.xpose.msra.mxu0 0
        %525 = vmatpush.bf16.xpose.msra.mxu0 0
        %526 = vmatpush.bf16.xpose.msra.mxu0 0
        %527 = vmatpush.bf16.xpose.msra.mxu0 %v518
        %528 = vmatmul.bf16.gmra.mxu0 %v515
        %v529 = vpop.f32.mrf.mxu0
        %v530 = vadd.f32 0.0, %v529
        %v531 = vpop.f32.mrf.mxu0
        %532 = vdwg.mxu0
        %v533 = vsel %vm341, %v530, -inf
        %534 = vmax.xlane.f32.xlu0 %v533
        %v535 = vpop.xlane.xlu0 %534
        %v536 = vsub.f32 %v530, %v535
        %v537 = vmul.f32 %v536, 1.442695
        %v538 = vpow.pop %v537
        %v539 = vsel %vm341, %v538, 0.0
        %540 = vadd.xlane.f32.xlu0 %v539
        %v541 = vpop.xlane.xlu0 %540
        %v542 = vrcp.pop %v541
        %v543 = vmul.f32 %v538, %v542
        %v544 = vpack.c.bf16 %v543, %v543
        %545 = vrot.lane.b32.xlu0 %v338, 40
        %v546 = vpop.permute.xlu0 %545
        %v548 = vsel %vm341, %v544, 0
        %v551 = vsel %vm378, %v546, 0
        %553 = vmatpush.bf16.msra.mxu0 0
        %554 = vmatpush.bf16.msra.mxu0 0
        %555 = vmatpush.bf16.msra.mxu0 0
        %556 = vmatpush.bf16.msra.mxu0 0
        %557 = vmatpush.bf16.msra.mxu0 0
        %558 = vmatpush.bf16.msra.mxu0 0
        %559 = vmatpush.bf16.msra.mxu0 0
        %560 = vmatpush.bf16.msra.mxu0 %v551
        %561 = vmatmul.bf16.gmra.mxu0 %v548
        %v562 = vpop.f32.mrf.mxu0
        %v563 = vadd.f32 0.0, %v562
        %v564 = vpop.f32.mrf.mxu0
        %565 = vdwg.mxu0
        %v566 = vpack.c.bf16 %v563, %v563
        %v568 = vunpack.c.l.b16 %v452
        %v569 = vpack.c.b16 %v568, %v568
        %570 = vrot.lane.b32.xlu0 %v569, 8
        %v571 = vpop.permute.xlu0 %570
        %v573 = vunpack.c.l.b16 %v509
        %v574 = vpack.c.b16 %v573, %v573
        %575 = vrot.lane.b32.xlu0 %v574, 16
        %v576 = vpop.permute.xlu0 %575
        %v578 = vunpack.c.l.b16 %v566
        %v579 = vpack.c.b16 %v578, %v578
        %580 = vrot.lane.b32.xlu0 %v579, 24
        %v581 = vpop.permute.xlu0 %580
        %v584 = vsel %vm341, %v395, %v571
        %vm585 = vcmask 130048
        %v587 = vsel %vm585, %v584, %v576
        %vm588 = vcmask 195584
        %v590 = vsel %vm588, %v587, %v581
        %v591 = vld [vmem:[#allocation8] sm:$0xf]
        %v592 = vld [vmem:[#allocation8 + $0x4] sm:$0xf]
        %v593 = vld [vmem:[#allocation8 + $0x8] sm:$0xf]
        %v594 = vld [vmem:[#allocation8 + $0xc] sm:$0xf]
        %v595 = vld [vmem:[%s4] sm:$0x1]
        %v597 = vperm.slane %v595, 0
        %v603 = vunpack.c.l.b16 %v591
        %v604 = vunpack.c.l.b16 %v592
        %v605 = vunpack.c.l.b16 %v593
        %v606 = vunpack.c.l.b16 %v594
        %v607 = vpack.c.b16 %v604, %v603
        %v608 = vpack.c.b16 %v606, %v605
        %vm611 = vcmask 261120
        %v612 = vsel %vm611, %v590, 0
        %614 = vmatpush.bf16.msra.mxu0 0
        %615 = vmatpush.bf16.msra.mxu0 0
        %616 = vmatpush.bf16.msra.mxu0 0
        %617 = vmatpush.bf16.msra.mxu0 0
        %618 = vmatpush.bf16.msra.mxu0 0
        %619 = vmatpush.bf16.msra.mxu0 0
        %620 = vmatpush.bf16.msra.mxu0 %v608
        %621 = vmatpush.bf16.msra.mxu0 %v607
        %622 = vmatmul.bf16.gmra.mxu0 %v612
        %v623 = vpop.f32.mrf.mxu0
        %v624 = vadd.f32 %v597, %v623
        %v625 = vpop.f32.mrf.mxu0
        %626 = vdwg.mxu0
        %627 = vst.msk [vmem:[%s288] sm:$0xff] %vm611, %v624
        %s628 = sand.u32 %s155, 1
        %s629 = scalar_lea.sflag [#allocation5], %s628
        %s630 = sand.u32 %s155, 1
        %s631 = smul.addr %s630, 8
        %s632 = scalar_lea.vmem [#allocation9], %s631
        // Predicated region
        $region57: #{tpu_custom_call.1} parent=39 // pred_check
          %p633 = pneg %p165
        $region58: #{tpu_custom_call.1} parent=39 // pred_check_branch
          %635 = sbr.rel (%p633) target = $region60
        $region59: #{tpu_custom_call.1} parent=39 // pred_region
          %637 = vsyncadd %s629, 0
          %s638 = sadd.s32 %s28, %s27
          %s639 = smul.addr %s638, 8
          %s640 = scalar_lea.hbm %s5, %s639
          %s642 = sshll.u32 %s632, 4
          %s643 = int_to_ptr.vmem [resolvable:$true] %s642
          %s644 = sshll.u32 %s640, 4
          %s645 = int_to_ptr.hbm [resolvable:$true] %s644
          %647 = dma.vmem_to_hbm [thread:$0]  %s643, 128, %s645, %s629
        $region60: #{tpu_custom_call.1} parent=39 // pred_fallthru
          _
      $region40: #{tpu_custom_call.1} parent=5 // pred_fallthru
        _
      %p648 = scmp.le.s32.totalorder 2, %s18
      // Predicated region
      $region61: #{tpu_custom_call.1} parent=5 // pred_check
        %p649 = pneg %p648
      $region62: #{tpu_custom_call.1} parent=5 // pred_check_branch
        %651 = sbr.rel (%p649) target = $region64
      $region63: #{tpu_custom_call.1} parent=5 // pred_region
        %s652 = ssub.s32 %s18, 2
        // Predicated region
        $region65: #{tpu_custom_call.1} parent=63 // pred_check
          %p653 = pneg %p171
        $region66: #{tpu_custom_call.1} parent=63 // pred_check_branch
          %655 = sbr.rel (%p653) target = $region68
        $region67: #{tpu_custom_call.1} parent=63 // pred_region
          %s656 = sand.u32 %s156, 1
          %s657 = scalar_lea.sflag [#allocation5], %s656
          %s658 = sand.u32 %s156, 1
          %s659 = smul.addr %s658, 8
          %s660 = scalar_lea.vmem [#allocation9], %s659
          %662 = dma.done %s657, 128
        $region68: #{tpu_custom_call.1} parent=63 // pred_fallthru
          _
      $region64: #{tpu_custom_call.1} parent=5 // pred_fallthru
        _
    $region6: #{tpu_custom_call.1} parent=1 // loop_footer
      %s22 = sadd.s32 1, %s18
    $region7: #{tpu_custom_call.1} parent=1 // loop_footer_branch
      %17 = sbr.rel target = $region3
    $region8: #{tpu_custom_call.1} parent=1 // loop_exit
      _
    %663 = vsyncpa [#allocation4], 1
    %s664 = scalar_lea.sflag [#allocation4], 1
    %665 = vsyncpa %s664, 1
    %666 = vsyncpa [#allocation7], 1
    %667 = vsyncpa [#allocation5], 1
    %s668 = scalar_lea.sflag [#allocation5], 1
    %669 = vsyncpa %s668, 1

</llo_original>
